<compile_context>
chip_gen: v6e
topology: v6e:2x2x1
jax: 0.10.0
libtpu: 0.0.40
codegen_flags: <defaults>
</compile_context>

<pallas_src>
import functools

import jax
import jax.numpy as jnp
from jax.experimental import pallas as pl
from jax.experimental.pallas import tpu as pltpu

_LANES = 128


def _sublanes(dtype):
    # f32 -> 8 rows / tile, bf16 -> 16, int8 -> 32.
    return 32 // jnp.dtype(dtype).itemsize


def _round_up(n, m):
    return -(-n // m) * m


# ---------------------------------------------------------------------------
# kernel
# ---------------------------------------------------------------------------
def _dueling_kernel(x_ref, s_ref, out_ref, *, n_in, n_out, woffs, boffs,
                    bias_rows):
    """3-layer trunk + fused dueling heads, all from one packed VMEM slab.

    Slab layout (rows): [W1 | W2 | W3 | Wh | Wo | b1 b2 b3 bh bo], every block
    zero-padded to the full 128-lane width; blocks 2..5 are also zero-padded to
    128 contraction rows so the previous layer's full-lane activation feeds the
    next MXU pass directly (padded rows/cols contribute nothing).
    """
    f32 = jnp.float32
    relu = lambda t: jnp.maximum(t, 0.0)
    batch = x_ref.shape[0]
    width = s_ref.shape[1]
    wrows = (n_in, width, width, width, width)

    def bias(i):
        off = boffs[i]
        if batch <= bias_rows:
            # bias is replicated across `bias_rows` sublanes at pack time:
            # exact-shape add, no sublane broadcast on the critical path.
            return s_ref[off:off + batch, :]
        return s_ref[off:off + 1, :]            # large blocks: (1, W) broadcast

    def layer(h, i, act):
        off = woffs[i]
        y = jnp.dot(h, s_ref[off:off + wrows[i], :],
                    preferred_element_type=f32) + bias(i)
        return relu(y) if act else y

    h = layer(x_ref[...], 0, True)              # trunk Linear+ReLU x3
    h = layer(h, 1, True)
    h = layer(h, 2, True)
    av = layer(h, 3, True)                      # fused [adv_hidden | val_hidden]
    out = layer(av, 4, False)                   # fused output, mean pre-folded
    out_ref[...] = out[:, :n_out]               # single lane-sparse store


# ---------------------------------------------------------------------------
# parameter packing (off the hot path, done once)
# ---------------------------------------------------------------------------
def pack_params(params, n_in, n_mid, n_out):
    """Fold the dueling mean into the adv weights, fuse the two heads, and pack
    all weights AND biases into a single lane-dense (rows, 128) f32 slab."""
    (w1, b1, w2, b2, w3, b3, wa1, ba1, wa2, ba2, wv1, bv1, wv2, bv2) = params
    dtype = jnp.float32
    sub = _sublanes(dtype)

    # fold  adv - adv.mean(1, keepdims=True)  into the adv output weights/bias
    wa2f = wa2 - jnp.mean(wa2, axis=1, keepdims=True)
    ba2f = ba2 - jnp.mean(ba2)

    # fuse adv/val heads:   av = relu(h @ [wa1|wv1] + [ba1|bv1])
    #                       out = av @ [wa2f ; tile(wv2)] + (ba2f + bv2)
    wh = jnp.concatenate([wa1, wv1], axis=1)                                # (n_mid, 2*n_mid)
    bh = jnp.concatenate([ba1, bv1], axis=1)                                # (1, 2*n_mid)
    wo = jnp.concatenate([wa2f, jnp.broadcast_to(wv2, (n_mid, n_out))], 0)  # (2*n_mid, n_out)
    bo = ba2f + bv2                                                         # (1, n_out)

    weights = [w1, w2, w3, wh, wo]
    biases = [b1, b2, b3, bh, bo]

    need = max(max(w.shape[1] for w in weights),
               max(w.shape[0] for w in weights[1:]))
    width = _round_up(max(need, _LANES), _LANES)        # full-lane slab

    # Block 0 only needs n_in rows (x has n_in columns); later blocks are
    # padded to `width` rows so full-lane activations feed straight in.
    wrows = [_round_up(n_in, sub)] + [width] * (len(weights) - 1)
    woffs, cur = [], 0
    for r in wrows:
        woffs.append(cur)
        cur += r
    boffs = []
    for _ in biases:
        boffs.append(cur)
        cur += sub                                       # bias replicated x sub
    total = _round_up(cur, sub)

    slab = jnp.zeros((total, width), dtype)
    for off, w in zip(woffs, weights):
        slab = slab.at[off:off + w.shape[0], :w.shape[1]].set(w.astype(dtype))
    for off, b in zip(boffs, biases):
        slab = slab.at[off:off + sub, :b.shape[1]].set(
            jnp.broadcast_to(b.astype(dtype), (sub, b.shape[1])))

    meta = dict(n_in=n_in, n_mid=n_mid, n_out=n_out,
                woffs=tuple(woffs), boffs=tuple(boffs),
                bias_rows=sub, slab_shape=(total, width))
    return slab, meta


# ---------------------------------------------------------------------------
# wrapper
# ---------------------------------------------------------------------------
def dueling_forward(x, slab, meta, *, block_batch=512):
    batch, n_in = x.shape
    n_out = meta["n_out"]
    # offsets are only valid for the slab produced together with this meta
    assert tuple(slab.shape) == tuple(meta["slab_shape"]), \
        "weight slab does not match packing metadata"
    assert n_in == meta["n_in"]

    kernel = functools.partial(
        _dueling_kernel, n_in=n_in, n_out=n_out,
        woffs=meta["woffs"], boffs=meta["boffs"],
        bias_rows=meta["bias_rows"])

    gridless = (batch <= block_batch or batch % block_batch != 0
                or block_batch % 8 != 0)
    if gridless:
        # Small inference batch: single invocation, everything VMEM-resident.
        vmem = pl.BlockSpec(memory_space=pltpu.MemorySpace.VMEM)
        return pl.pallas_call(
            kernel,
            out_shape=jax.ShapeDtypeStruct((batch, n_out), jnp.float32),
            in_specs=[vmem, vmem],
            out_specs=vmem,
        )(x, slab)

    # Large-batch path: parallel batch grid axis (v7x: uses both TensorCores);
    # the constant index_map keeps the weight slab VMEM-resident across all
    # grid steps so its DMA is paid once per call.
    return pl.pallas_call(
        kernel,
        out_shape=jax.ShapeDtypeStruct((batch, n_out), jnp.float32),
        grid=(batch // block_batch,),
        in_specs=[pl.BlockSpec((block_batch, n_in), lambda i: (i, 0)),
                  pl.BlockSpec(slab.shape, lambda i: (0, 0))],
        out_specs=pl.BlockSpec((block_batch, n_out), lambda i: (i, 0)),
        compiler_params=pltpu.CompilerParams(
            dimension_semantics=("parallel",)),
    )(x, slab)


# ---------------------------------------------------------------------------
# parameter init (PyTorch nn.Linear default) + pure-JAX reference
# ---------------------------------------------------------------------------
def _init_linear(key, fan_in, fan_out):
    kw, kb = jax.random.split(key)
    bound = 1.0 / jnp.sqrt(jnp.float32(fan_in))
    w = jax.random.uniform(kw, (fan_in, fan_out), jnp.float32, -bound, bound)
    b = jax.random.uniform(kb, (1, fan_out), jnp.float32, -bound, bound)
    return w, b


def _init_params(key, n_in, n_mid, n_out):
    keys = jax.random.split(key, 7)
    w1, b1 = _init_linear(keys[0], n_in, n_mid)
    w2, b2 = _init_linear(keys[1], n_mid, n_mid)
    w3, b3 = _init_linear(keys[2], n_mid, n_mid)
    wa1, ba1 = _init_linear(keys[3], n_mid, n_mid)
    wa2, ba2 = _init_linear(keys[4], n_mid, n_out)
    wv1, bv1 = _init_linear(keys[5], n_mid, n_mid)
    wv2, bv2 = _init_linear(keys[6], n_mid, 1)
    return (w1, b1, w2, b2, w3, b3, wa1, ba1, wa2, ba2, wv1, bv1, wv2, bv2)


def _reference_forward(x, params):
    (w1, b1, w2, b2, w3, b3, wa1, ba1, wa2, ba2, wv1, bv1, wv2, bv2) = params
    relu = lambda t: jnp.maximum(t, 0.0)
    h = relu(x @ w1 + b1)
    h = relu(h @ w2 + b2)
    h = relu(h @ w3 + b3)
    adv = relu(h @ wa1 + ba1) @ wa2 + ba2
    val = relu(h @ wv1 + bv1) @ wv2 + bv2
    return val + adv - jnp.mean(adv, axis=1, keepdims=True)


if __name__ == "__main__":
    # config: observation_size=16, hidden_size=32, action_size=4
    batch, n_in, n_mid, n_out = 8, 16, 32, 4

    key = jax.random.PRNGKey(0)
    k_x, k_p, k_xb = jax.random.split(key, 3)
    x = jax.random.normal(k_x, (batch, n_in), jnp.float32)
    params = _init_params(k_p, n_in, n_mid, n_out)
    slab, meta = pack_params(params, n_in, n_mid, n_out)

    # 1) small-batch (grid-less) path — the typical RL acting step
    out = jax.block_until_ready(dueling_forward(x, slab, meta))
    ref = _reference_forward(x, params)
    assert out.shape == (batch, n_out)
    err = float(jnp.max(jnp.abs(out - ref)))
    assert jnp.allclose(out, ref, atol=1e-4, rtol=1e-4), f"max abs err {err}"

    # 2) large-batch (parallel batch grid) path — amortizes fixed per-call
    #    cost and uses both TensorCores on v7x; weight slab DMA'd once.
    xb = jax.random.normal(k_xb, (256, n_in), jnp.float32)
    outb = jax.block_until_ready(
        dueling_forward(xb, slab, meta, block_batch=128))
    refb = _reference_forward(xb, params)
    errb = float(jnp.max(jnp.abs(outb - refb)))
    assert jnp.allclose(outb, refb, atol=1e-4, rtol=1e-4), f"max abs err {errb}"

    print("KERNEL_OK")
</pallas_src>

<mosaic_0001>
module attributes {stable_mosaic.version = 11 : i64} {
  func.func @_dueling_kernel(%arg0: memref<8x16xf32, #tpu.memory_space<vmem>>, %arg1: memref<568x128xf32, #tpu.memory_space<vmem>>, %arg2: memref<8x4xf32, #tpu.memory_space<vmem>>) attributes {dimension_semantics = [], scalar_prefetch = 0 : i64, scratch_operands = 0 : i64, tpu.core_type = #tpu.core_type<tc>} {
    %c0 = arith.constant 0 : index
    %c0_0 = arith.constant 0 : index
    %0 = vector.load %arg0[%c0, %c0_0] : memref<8x16xf32, #tpu.memory_space<vmem>>, vector<8x16xf32>
    %c0_1 = arith.constant 0 : index
    %c0_2 = arith.constant 0 : index
    %1 = vector.load %arg1[%c0_1, %c0_2] : memref<568x128xf32, #tpu.memory_space<vmem>>, vector<16x128xf32>
    %cst = arith.constant dense<0.000000e+00> : vector<8x128xf32>
    %2 = tpu.matmul %0, %1, %cst {dimension_numbers = #tpu.dot_dimension_numbers<[1], [0], [0], [1], [0, 0, 1, 1], [], []>} : vector<8x16xf32>, vector<16x128xf32>, vector<8x128xf32> -> vector<8x128xf32>
    %c528 = arith.constant 528 : index
    %c0_3 = arith.constant 0 : index
    %3 = vector.load %arg1[%c528, %c0_3] : memref<568x128xf32, #tpu.memory_space<vmem>>, vector<8x128xf32>
    %4 = arith.addf %2, %3 : vector<8x128xf32>
    %cst_4 = arith.constant 0.000000e+00 : f32
    %5 = vector.broadcast %cst_4 : f32 to vector<8x128xf32>
    %6 = arith.maximumf %4, %5 : vector<8x128xf32>
    %c16 = arith.constant 16 : index
    %c0_5 = arith.constant 0 : index
    %7 = vector.load %arg1[%c16, %c0_5] : memref<568x128xf32, #tpu.memory_space<vmem>>, vector<128x128xf32>
    %cst_6 = arith.constant dense<0.000000e+00> : vector<8x128xf32>
    %8 = tpu.matmul %6, %7, %cst_6 {dimension_numbers = #tpu.dot_dimension_numbers<[1], [0], [0], [1], [0, 0, 1, 1], [], []>} : vector<8x128xf32>, vector<128x128xf32>, vector<8x128xf32> -> vector<8x128xf32>
    %c536 = arith.constant 536 : index
    %c0_7 = arith.constant 0 : index
    %9 = vector.load %arg1[%c536, %c0_7] : memref<568x128xf32, #tpu.memory_space<vmem>>, vector<8x128xf32>
    %10 = arith.addf %8, %9 : vector<8x128xf32>
    %cst_8 = arith.constant 0.000000e+00 : f32
    %11 = vector.broadcast %cst_8 : f32 to vector<8x128xf32>
    %12 = arith.maximumf %10, %11 : vector<8x128xf32>
    %c144 = arith.constant 144 : index
    %c0_9 = arith.constant 0 : index
    %13 = vector.load %arg1[%c144, %c0_9] : memref<568x128xf32, #tpu.memory_space<vmem>>, vector<128x128xf32>
    %cst_10 = arith.constant dense<0.000000e+00> : vector<8x128xf32>
    %14 = tpu.matmul %12, %13, %cst_10 {dimension_numbers = #tpu.dot_dimension_numbers<[1], [0], [0], [1], [0, 0, 1, 1], [], []>} : vector<8x128xf32>, vector<128x128xf32>, vector<8x128xf32> -> vector<8x128xf32>
    %c544 = arith.constant 544 : index
    %c0_11 = arith.constant 0 : index
    %15 = vector.load %arg1[%c544, %c0_11] : memref<568x128xf32, #tpu.memory_space<vmem>>, vector<8x128xf32>
    %16 = arith.addf %14, %15 : vector<8x128xf32>
    %cst_12 = arith.constant 0.000000e+00 : f32
    %17 = vector.broadcast %cst_12 : f32 to vector<8x128xf32>
    %18 = arith.maximumf %16, %17 : vector<8x128xf32>
    %c272 = arith.constant 272 : index
    %c0_13 = arith.constant 0 : index
    %19 = vector.load %arg1[%c272, %c0_13] : memref<568x128xf32, #tpu.memory_space<vmem>>, vector<128x128xf32>
    %cst_14 = arith.constant dense<0.000000e+00> : vector<8x128xf32>
    %20 = tpu.matmul %18, %19, %cst_14 {dimension_numbers = #tpu.dot_dimension_numbers<[1], [0], [0], [1], [0, 0, 1, 1], [], []>} : vector<8x128xf32>, vector<128x128xf32>, vector<8x128xf32> -> vector<8x128xf32>
    %c552 = arith.constant 552 : index
    %c0_15 = arith.constant 0 : index
    %21 = vector.load %arg1[%c552, %c0_15] : memref<568x128xf32, #tpu.memory_space<vmem>>, vector<8x128xf32>
    %22 = arith.addf %20, %21 : vector<8x128xf32>
    %cst_16 = arith.constant 0.000000e+00 : f32
    %23 = vector.broadcast %cst_16 : f32 to vector<8x128xf32>
    %24 = arith.maximumf %22, %23 : vector<8x128xf32>
    %c400 = arith.constant 400 : index
    %c0_17 = arith.constant 0 : index
    %25 = vector.load %arg1[%c400, %c0_17] : memref<568x128xf32, #tpu.memory_space<vmem>>, vector<128x128xf32>
    %cst_18 = arith.constant dense<0.000000e+00> : vector<8x128xf32>
    %26 = tpu.matmul %24, %25, %cst_18 {dimension_numbers = #tpu.dot_dimension_numbers<[1], [0], [0], [1], [0, 0, 1, 1], [], []>} : vector<8x128xf32>, vector<128x128xf32>, vector<8x128xf32> -> vector<8x128xf32>
    %c560 = arith.constant 560 : index
    %c0_19 = arith.constant 0 : index
    %27 = vector.load %arg1[%c560, %c0_19] : memref<568x128xf32, #tpu.memory_space<vmem>>, vector<8x128xf32>
    %28 = arith.addf %26, %27 : vector<8x128xf32>
    %29 = vector.extract_strided_slice %28 {offsets = [0, 0], sizes = [8, 4], strides = [1, 1]} : vector<8x128xf32> to vector<8x4xf32>
    %c0_20 = arith.constant 0 : index
    %c0_21 = arith.constant 0 : index
    %30 = vector.load %arg2[%c0_20, %c0_21] : memref<8x4xf32, #tpu.memory_space<vmem>>, vector<8x4xf32>
    tpu.vector_store %arg2[%c0_20, %c0_21], %29 {strides = array<i32>} : memref<8x4xf32, #tpu.memory_space<vmem>>, vector<8x4xf32>,
    return
  }
}

</mosaic_0001>

<llo_original>
// kernel: tpu_custom_call.1
$region0: #{tpu_custom_call.1}
  #allocation0 [shape = 'u32[]', space=smem, size = 0x4, offset = 0x4, fixed_abs, tag = 'smem constant byte address 0x4 - core index']
  #allocation1 [shape = 'u32[144,128]{1,0:T(1,128)}', space=vmem, size = 0x12000, scoped, tag = 'internal scratch']
  %s0 = inlined_call_operand.hbm [shape: f32[8,16], index: 0, kind: input, shape index: {}]
  %s1 = inlined_call_operand.hbm [shape: f32[568,128], index: 1, kind: input, shape index: {}]
  %s2 = inlined_call_operand.vmem [shape: f32[8,4], index: 2, kind: output, shape index: {}]
  %s3 = sld [smem:[#allocation0]]
  $region26: #{tpu_custom_call.1} parent=0
    _
  %s5 = ssub.s32 1, %s3
  %s6 = scalar_select 0, %s5, %s3
  $region1: #{tpu_custom_call.1} parent=0
    #allocation2 [shape = 'u8[4096]{0}', space=vmem, size = 0x1000, scoped, tag = 'input window, operand 0, single buffered']
    #allocation3 [shape = 's32[1]{0}', space=sflag, size = 0x4, scoped, tag = 'scoped memory for tpu_custom_call.1']
    #allocation4 [shape = 'u8[290816]{0}', space=vmem, size = 0x47000, scoped, tag = 'input window, operand 1, single buffered']
    #allocation5 [shape = 's32[1]{0}', space=sflag, size = 0x4, scoped, tag = 'scoped memory for tpu_custom_call.1']
    %7 = vsyncpa [#allocation3], 0
    %8 = vsyncpa [#allocation5], 0
    // Predicated region
    $region2: #{tpu_custom_call.1} parent=1 // pred_check
      _
    $region3: #{tpu_custom_call.1} parent=1 // pred_check_branch
      %10 = sbr.rel (0) target = $region5
    $region4: #{tpu_custom_call.1} parent=1 // pred_region
      %s12 = ssub.s32 128, 128
      %13 = vsyncadd [#allocation3], %s12
      %s15 = sshll.u32 [#allocation2], 4
      %s16 = int_to_ptr.vmem [resolvable:$true] %s15
      %18 = dma.hbm_to_vmem [thread:$0]  %s0, 128, %s16, [#allocation3]
    $region5: #{tpu_custom_call.1} parent=1 // pred_fallthru
      _
    // Predicated region
    $region6: #{tpu_custom_call.1} parent=1 // pred_check
      _
    $region7: #{tpu_custom_call.1} parent=1 // pred_check_branch
      %20 = sbr.rel (0) target = $region9
    $region8: #{tpu_custom_call.1} parent=1 // pred_region
      %s22 = ssub.s32 9088, 9088
      %23 = vsyncadd [#allocation5], %s22
      %s24 = sshll.u32 [#allocation4], 4
      %s25 = int_to_ptr.vmem [resolvable:$true] %s24
      %30 = dma.hbm_to_vmem [thread:$0]  %s1, 9088, %s25, [#allocation5], 128, 128, 8
    $region9: #{tpu_custom_call.1} parent=1 // pred_fallthru
      _
    // Predicated region
    $region10: #{tpu_custom_call.1} parent=1 // pred_check
      _
    $region11: #{tpu_custom_call.1} parent=1 // pred_check_branch
      %32 = sbr.rel (0) target = $region13
    $region12: #{tpu_custom_call.1} parent=1 // pred_region
      %33 = dma.done [#allocation3], 128
    $region13: #{tpu_custom_call.1} parent=1 // pred_fallthru
      _
    // Predicated region
    $region14: #{tpu_custom_call.1} parent=1 // pred_check
      _
    $region15: #{tpu_custom_call.1} parent=1 // pred_check_branch
      %35 = sbr.rel (0) target = $region17
    $region16: #{tpu_custom_call.1} parent=1 // pred_region
      %36 = dma.done [#allocation5], 9088
    $region17: #{tpu_custom_call.1} parent=1 // pred_fallthru
      _
    %v37 = vld [vmem:[#allocation2] sm:$0xff]
    %v38 = vld [vmem:[#allocation4] sm:$0xff]
    %v39 = vld [vmem:[#allocation4 + $0x8] sm:$0xff]
    %v40 = vld [vmem:[#allocation4 + $0x210] sm:$0xff]
    %vm41 = vcmask 130048
    %v43 = vsel %vm41, %v37, 0
    %45 = vmatprep.subr.mxu0 0.0
    %46 = vmatpush1.msra.mxu0 0.0
    %47 = vmatprep.subr.mxu0 0.0
    %48 = vmatpush1.msra.mxu0 0.0
    %49 = vmatprep.subr.mxu0 0.0
    %50 = vmatpush1.msra.mxu0 0.0
    %51 = vmatprep.subr.mxu0 0.0
    %52 = vmatpush1.msra.mxu0 0.0
    %53 = vmatprep.subr.mxu0 0.0
    %54 = vmatpush1.msra.mxu0 0.0
    %55 = vmatprep.subr.mxu0 0.0
    %56 = vmatpush1.msra.mxu0 0.0
    %57 = vmatprep.subr.mxu0 0.0
    %58 = vmatpush1.msra.mxu0 0.0
    %59 = vmatprep.subr.mxu0 0.0
    %60 = vmatpush1.msra.mxu0 0.0
    %61 = vmatprep.subr.mxu0 0.0
    %62 = vmatpush1.msra.mxu0 0.0
    %63 = vmatprep.subr.mxu0 0.0
    %64 = vmatpush1.msra.mxu0 0.0
    %65 = vmatprep.subr.mxu0 0.0
    %66 = vmatpush1.msra.mxu0 0.0
    %67 = vmatprep.subr.mxu0 0.0
    %68 = vmatpush1.msra.mxu0 0.0
    %69 = vmatprep.subr.mxu0 0.0
    %70 = vmatpush1.msra.mxu0 0.0
    %71 = vmatprep.subr.mxu0 0.0
    %72 = vmatpush1.msra.mxu0 0.0
    %73 = vmatprep.subr.mxu0 0.0
    %74 = vmatpush1.msra.mxu0 %v39
    %75 = vmatprep.subr.mxu0 0.0
    %76 = vmatpush1.msra.mxu0 %v38
    %77 = vmatprep.subr.mxu0 0.0
    %78 = vmatpush2.msra.mxu0 0.0
    %79 = vmatprep.subr.mxu0 0.0
    %80 = vmatpush2.msra.mxu0 0.0
    %81 = vmatprep.subr.mxu0 0.0
    %82 = vmatpush2.msra.mxu0 0.0
    %83 = vmatprep.subr.mxu0 0.0
    %84 = vmatpush2.msra.mxu0 0.0
    %85 = vmatprep.subr.mxu0 0.0
    %86 = vmatpush2.msra.mxu0 0.0
    %87 = vmatprep.subr.mxu0 0.0
    %88 = vmatpush2.msra.mxu0 0.0
    %89 = vmatprep.subr.mxu0 0.0
    %90 = vmatpush2.msra.mxu0 0.0
    %91 = vmatprep.subr.mxu0 0.0
    %92 = vmatpush2.msra.mxu0 0.0
    %93 = vmatprep.subr.mxu0 0.0
    %94 = vmatpush2.msra.mxu0 0.0
    %95 = vmatprep.subr.mxu0 0.0
    %96 = vmatpush2.msra.mxu0 0.0
    %97 = vmatprep.subr.mxu0 0.0
    %98 = vmatpush2.msra.mxu0 0.0
    %99 = vmatprep.subr.mxu0 0.0
    %100 = vmatpush2.msra.mxu0 0.0
    %101 = vmatprep.subr.mxu0 0.0
    %102 = vmatpush2.msra.mxu0 0.0
    %103 = vmatprep.subr.mxu0 0.0
    %104 = vmatpush2.msra.mxu0 0.0
    %105 = vmatprep.subr.mxu0 0.0
    %106 = vmatpush2.msra.mxu0 0.0
    %107 = vmatprep.subr.mxu0 0.0
    %108 = vmatpush2.msra.mxu0 0.0
    %109 = vmatprep.mubr.f32.mxu0 0.0
    %110 = vmatmul.mubr.f32.gmra.mxu0 %v43
    %v111 = vpop.f32.mrf.mxu0
    %v112 = vadd.f32 %v40, %v111
    %v113 = vpop.f32.mrf.mxu0
    %114 = vdwg.mxu0
    %v115 = vmax.f32 %v112, 0.0
    %v116 = vld [vmem:[#allocation4 + $0x10] sm:$0xff]
    %v117 = vld [vmem:[#allocation4 + $0x18] sm:$0xff]
    %v118 = vld [vmem:[#allocation4 + $0x20] sm:$0xff]
    %v119 = vld [vmem:[#allocation4 + $0x28] sm:$0xff]
    %v120 = vld [vmem:[#allocation4 + $0x30] sm:$0xff]
    %v121 = vld [vmem:[#allocation4 + $0x38] sm:$0xff]
    %v122 = vld [vmem:[#allocation4 + $0x40] sm:$0xff]
    %v123 = vld [vmem:[#allocation4 + $0x48] sm:$0xff]
    %v124 = vld [vmem:[#allocation4 + $0x50] sm:$0xff]
    %v125 = vld [vmem:[#allocation4 + $0x58] sm:$0xff]
    %v126 = vld [vmem:[#allocation4 + $0x60] sm:$0xff]
    %v127 = vld [vmem:[#allocation4 + $0x68] sm:$0xff]
    %v128 = vld [vmem:[#allocation4 + $0x70] sm:$0xff]
    %v129 = vld [vmem:[#allocation4 + $0x78] sm:$0xff]
    %v130 = vld [vmem:[#allocation4 + $0x80] sm:$0xff]
    %v131 = vld [vmem:[#allocation4 + $0x88] sm:$0xff]
    %v132 = vld [vmem:[#allocation4 + $0x218] sm:$0xff]
    %133 = vmatprep.subr.mxu0 0.0
    %134 = vmatpush1.msra.mxu0 %v131
    %135 = vmatprep.subr.mxu0 0.0
    %136 = vmatpush1.msra.mxu0 %v130
    %137 = vmatprep.subr.mxu0 0.0
    %138 = vmatpush1.msra.mxu0 %v129
    %139 = vmatprep.subr.mxu0 0.0
    %140 = vmatpush1.msra.mxu0 %v128
    %141 = vmatprep.subr.mxu0 0.0
    %142 = vmatpush1.msra.mxu0 %v127
    %143 = vmatprep.subr.mxu0 0.0
    %144 = vmatpush1.msra.mxu0 %v126
    %145 = vmatprep.subr.mxu0 0.0
    %146 = vmatpush1.msra.mxu0 %v125
    %147 = vmatprep.subr.mxu0 0.0
    %148 = vmatpush1.msra.mxu0 %v124
    %149 = vmatprep.subr.mxu0 0.0
    %150 = vmatpush1.msra.mxu0 %v123
    %151 = vmatprep.subr.mxu0 0.0
    %152 = vmatpush1.msra.mxu0 %v122
    %153 = vmatprep.subr.mxu0 0.0
    %154 = vmatpush1.msra.mxu0 %v121
    %155 = vmatprep.subr.mxu0 0.0
    %156 = vmatpush1.msra.mxu0 %v120
    %157 = vmatprep.subr.mxu0 0.0
    %158 = vmatpush1.msra.mxu0 %v119
    %159 = vmatprep.subr.mxu0 0.0
    %160 = vmatpush1.msra.mxu0 %v118
    %161 = vmatprep.subr.mxu0 0.0
    %162 = vmatpush1.msra.mxu0 %v117
    %163 = vmatprep.subr.mxu0 0.0
    %164 = vmatpush1.msra.mxu0 %v116
    %165 = vmatprep.subr.mxu0 0.0
    %166 = vmatpush2.msra.mxu0 0.0
    %167 = vmatprep.subr.mxu0 0.0
    %168 = vmatpush2.msra.mxu0 0.0
    %169 = vmatprep.subr.mxu0 0.0
    %170 = vmatpush2.msra.mxu0 0.0
    %171 = vmatprep.subr.mxu0 0.0
    %172 = vmatpush2.msra.mxu0 0.0
    %173 = vmatprep.subr.mxu0 0.0
    %174 = vmatpush2.msra.mxu0 0.0
    %175 = vmatprep.subr.mxu0 0.0
    %176 = vmatpush2.msra.mxu0 0.0
    %177 = vmatprep.subr.mxu0 0.0
    %178 = vmatpush2.msra.mxu0 0.0
    %179 = vmatprep.subr.mxu0 0.0
    %180 = vmatpush2.msra.mxu0 0.0
    %181 = vmatprep.subr.mxu0 0.0
    %182 = vmatpush2.msra.mxu0 0.0
    %183 = vmatprep.subr.mxu0 0.0
    %184 = vmatpush2.msra.mxu0 0.0
    %185 = vmatprep.subr.mxu0 0.0
    %186 = vmatpush2.msra.mxu0 0.0
    %187 = vmatprep.subr.mxu0 0.0
    %188 = vmatpush2.msra.mxu0 0.0
    %189 = vmatprep.subr.mxu0 0.0
    %190 = vmatpush2.msra.mxu0 0.0
    %191 = vmatprep.subr.mxu0 0.0
    %192 = vmatpush2.msra.mxu0 0.0
    %193 = vmatprep.subr.mxu0 0.0
    %194 = vmatpush2.msra.mxu0 0.0
    %195 = vmatprep.subr.mxu0 0.0
    %196 = vmatpush2.msra.mxu0 0.0
    %197 = vmatprep.mubr.f32.mxu0 0.0
    %198 = vmatmul.mubr.f32.gmra.mxu0 %v115
    %v199 = vpop.f32.mrf.mxu0
    %v200 = vadd.f32 %v132, %v199
    %v201 = vpop.f32.mrf.mxu0
    %202 = vdwg.mxu0
    %v203 = vmax.f32 %v200, 0.0
    %v204 = vld [vmem:[#allocation4 + $0x90] sm:$0xff]
    %v205 = vld [vmem:[#allocation4 + $0x98] sm:$0xff]
    %v206 = vld [vmem:[#allocation4 + $0xa0] sm:$0xff]
    %v207 = vld [vmem:[#allocation4 + $0xa8] sm:$0xff]
    %v208 = vld [vmem:[#allocation4 + $0xb0] sm:$0xff]
    %v209 = vld [vmem:[#allocation4 + $0xb8] sm:$0xff]
    %v210 = vld [vmem:[#allocation4 + $0xc0] sm:$0xff]
    %v211 = vld [vmem:[#allocation4 + $0xc8] sm:$0xff]
    %v212 = vld [vmem:[#allocation4 + $0xd0] sm:$0xff]
    %v213 = vld [vmem:[#allocation4 + $0xd8] sm:$0xff]
    %v214 = vld [vmem:[#allocation4 + $0xe0] sm:$0xff]
    %v215 = vld [vmem:[#allocation4 + $0xe8] sm:$0xff]
    %v216 = vld [vmem:[#allocation4 + $0xf0] sm:$0xff]
    %v217 = vld [vmem:[#allocation4 + $0xf8] sm:$0xff]
    %v218 = vld [vmem:[#allocation4 + $0x100] sm:$0xff]
    %v219 = vld [vmem:[#allocation4 + $0x108] sm:$0xff]
    %v220 = vld [vmem:[#allocation4 + $0x220] sm:$0xff]
    %221 = vmatprep.subr.mxu0 0.0
    %222 = vmatpush1.msra.mxu0 %v219
    %223 = vmatprep.subr.mxu0 0.0
    %224 = vmatpush1.msra.mxu0 %v218
    %225 = vmatprep.subr.mxu0 0.0
    %226 = vmatpush1.msra.mxu0 %v217
    %227 = vmatprep.subr.mxu0 0.0
    %228 = vmatpush1.msra.mxu0 %v216
    %229 = vmatprep.subr.mxu0 0.0
    %230 = vmatpush1.msra.mxu0 %v215
    %231 = vmatprep.subr.mxu0 0.0
    %232 = vmatpush1.msra.mxu0 %v214
    %233 = vmatprep.subr.mxu0 0.0
    %234 = vmatpush1.msra.mxu0 %v213
    %235 = vmatprep.subr.mxu0 0.0
    %236 = vmatpush1.msra.mxu0 %v212
    %237 = vmatprep.subr.mxu0 0.0
    %238 = vmatpush1.msra.mxu0 %v211
    %239 = vmatprep.subr.mxu0 0.0
    %240 = vmatpush1.msra.mxu0 %v210
    %241 = vmatprep.subr.mxu0 0.0
    %242 = vmatpush1.msra.mxu0 %v209
    %243 = vmatprep.subr.mxu0 0.0
    %244 = vmatpush1.msra.mxu0 %v208
    %245 = vmatprep.subr.mxu0 0.0
    %246 = vmatpush1.msra.mxu0 %v207
    %247 = vmatprep.subr.mxu0 0.0
    %248 = vmatpush1.msra.mxu0 %v206
    %249 = vmatprep.subr.mxu0 0.0
    %250 = vmatpush1.msra.mxu0 %v205
    %251 = vmatprep.subr.mxu0 0.0
    %252 = vmatpush1.msra.mxu0 %v204
    %253 = vmatprep.subr.mxu0 0.0
    %254 = vmatpush2.msra.mxu0 0.0
    %255 = vmatprep.subr.mxu0 0.0
    %256 = vmatpush2.msra.mxu0 0.0
    %257 = vmatprep.subr.mxu0 0.0
    %258 = vmatpush2.msra.mxu0 0.0
    %259 = vmatprep.subr.mxu0 0.0
    %260 = vmatpush2.msra.mxu0 0.0
    %261 = vmatprep.subr.mxu0 0.0
    %262 = vmatpush2.msra.mxu0 0.0
    %263 = vmatprep.subr.mxu0 0.0
    %264 = vmatpush2.msra.mxu0 0.0
    %265 = vmatprep.subr.mxu0 0.0
    %266 = vmatpush2.msra.mxu0 0.0
    %267 = vmatprep.subr.mxu0 0.0
    %268 = vmatpush2.msra.mxu0 0.0
    %269 = vmatprep.subr.mxu0 0.0
    %270 = vmatpush2.msra.mxu0 0.0
    %271 = vmatprep.subr.mxu0 0.0
    %272 = vmatpush2.msra.mxu0 0.0
    %273 = vmatprep.subr.mxu0 0.0
    %274 = vmatpush2.msra.mxu0 0.0
    %275 = vmatprep.subr.mxu0 0.0
    %276 = vmatpush2.msra.mxu0 0.0
    %277 = vmatprep.subr.mxu0 0.0
    %278 = vmatpush2.msra.mxu0 0.0
    %279 = vmatprep.subr.mxu0 0.0
    %280 = vmatpush2.msra.mxu0 0.0
    %281 = vmatprep.subr.mxu0 0.0
    %282 = vmatpush2.msra.mxu0 0.0
    %283 = vmatprep.subr.mxu0 0.0
    %284 = vmatpush2.msra.mxu0 0.0
    %285 = vmatprep.mubr.f32.mxu0 0.0
    %286 = vmatmul.mubr.f32.gmra.mxu0 %v203
    %v287 = vpop.f32.mrf.mxu0
    %v288 = vadd.f32 %v220, %v287
    %v289 = vpop.f32.mrf.mxu0
    %290 = vdwg.mxu0
    %v291 = vmax.f32 %v288, 0.0
    %v292 = vld [vmem:[#allocation4 + $0x110] sm:$0xff]
    %v293 = vld [vmem:[#allocation4 + $0x118] sm:$0xff]
    %v294 = vld [vmem:[#allocation4 + $0x120] sm:$0xff]
    %v295 = vld [vmem:[#allocation4 + $0x128] sm:$0xff]
    %v296 = vld [vmem:[#allocation4 + $0x130] sm:$0xff]
    %v297 = vld [vmem:[#allocation4 + $0x138] sm:$0xff]
    %v298 = vld [vmem:[#allocation4 + $0x140] sm:$0xff]
    %v299 = vld [vmem:[#allocation4 + $0x148] sm:$0xff]
    %v300 = vld [vmem:[#allocation4 + $0x150] sm:$0xff]
    %v301 = vld [vmem:[#allocation4 + $0x158] sm:$0xff]
    %v302 = vld [vmem:[#allocation4 + $0x160] sm:$0xff]
    %v303 = vld [vmem:[#allocation4 + $0x168] sm:$0xff]
    %v304 = vld [vmem:[#allocation4 + $0x170] sm:$0xff]
    %v305 = vld [vmem:[#allocation4 + $0x178] sm:$0xff]
    %v306 = vld [vmem:[#allocation4 + $0x180] sm:$0xff]
    %v307 = vld [vmem:[#allocation4 + $0x188] sm:$0xff]
    %v308 = vld [vmem:[#allocation4 + $0x228] sm:$0xff]
    %309 = vmatprep.subr.mxu0 0.0
    %310 = vmatpush1.msra.mxu0 %v307
    %311 = vmatprep.subr.mxu0 0.0
    %312 = vmatpush1.msra.mxu0 %v306
    %313 = vmatprep.subr.mxu0 0.0
    %314 = vmatpush1.msra.mxu0 %v305
    %315 = vmatprep.subr.mxu0 0.0
    %316 = vmatpush1.msra.mxu0 %v304
    %317 = vmatprep.subr.mxu0 0.0
    %318 = vmatpush1.msra.mxu0 %v303
    %319 = vmatprep.subr.mxu0 0.0
    %320 = vmatpush1.msra.mxu0 %v302
    %321 = vmatprep.subr.mxu0 0.0
    %322 = vmatpush1.msra.mxu0 %v301
    %323 = vmatprep.subr.mxu0 0.0
    %324 = vmatpush1.msra.mxu0 %v300
    %325 = vmatprep.subr.mxu0 0.0
    %326 = vmatpush1.msra.mxu0 %v299
    %327 = vmatprep.subr.mxu0 0.0
    %328 = vmatpush1.msra.mxu0 %v298
    %329 = vmatprep.subr.mxu0 0.0
    %330 = vmatpush1.msra.mxu0 %v297
    %331 = vmatprep.subr.mxu0 0.0
    %332 = vmatpush1.msra.mxu0 %v296
    %333 = vmatprep.subr.mxu0 0.0
    %334 = vmatpush1.msra.mxu0 %v295
    %335 = vmatprep.subr.mxu0 0.0
    %336 = vmatpush1.msra.mxu0 %v294
    %337 = vmatprep.subr.mxu0 0.0
    %338 = vmatpush1.msra.mxu0 %v293
    %339 = vmatprep.subr.mxu0 0.0
    %340 = vmatpush1.msra.mxu0 %v292
    %341 = vmatprep.subr.mxu0 0.0
    %342 = vmatpush2.msra.mxu0 0.0
    %343 = vmatprep.subr.mxu0 0.0
    %344 = vmatpush2.msra.mxu0 0.0
    %345 = vmatprep.subr.mxu0 0.0
    %346 = vmatpush2.msra.mxu0 0.0
    %347 = vmatprep.subr.mxu0 0.0
    %348 = vmatpush2.msra.mxu0 0.0
    %349 = vmatprep.subr.mxu0 0.0
    %350 = vmatpush2.msra.mxu0 0.0
    %351 = vmatprep.subr.mxu0 0.0
    %352 = vmatpush2.msra.mxu0 0.0
    %353 = vmatprep.subr.mxu0 0.0
    %354 = vmatpush2.msra.mxu0 0.0
    %355 = vmatprep.subr.mxu0 0.0
    %356 = vmatpush2.msra.mxu0 0.0
    %357 = vmatprep.subr.mxu0 0.0
    %358 = vmatpush2.msra.mxu0 0.0
    %359 = vmatprep.subr.mxu0 0.0
    %360 = vmatpush2.msra.mxu0 0.0
    %361 = vmatprep.subr.mxu0 0.0
    %362 = vmatpush2.msra.mxu0 0.0
    %363 = vmatprep.subr.mxu0 0.0
    %364 = vmatpush2.msra.mxu0 0.0
    %365 = vmatprep.subr.mxu0 0.0
    %366 = vmatpush2.msra.mxu0 0.0
    %367 = vmatprep.subr.mxu0 0.0
    %368 = vmatpush2.msra.mxu0 0.0
    %369 = vmatprep.subr.mxu0 0.0
    %370 = vmatpush2.msra.mxu0 0.0
    %371 = vmatprep.subr.mxu0 0.0
    %372 = vmatpush2.msra.mxu0 0.0
    %373 = vmatprep.mubr.f32.mxu0 0.0
    %374 = vmatmul.mubr.f32.gmra.mxu0 %v291
    %v375 = vpop.f32.mrf.mxu0
    %v376 = vadd.f32 %v308, %v375
    %v377 = vpop.f32.mrf.mxu0
    %378 = vdwg.mxu0
    %v379 = vmax.f32 %v376, 0.0
    %v380 = vld [vmem:[#allocation4 + $0x190] sm:$0xff]
    %v381 = vld [vmem:[#allocation4 + $0x198] sm:$0xff]
    %v382 = vld [vmem:[#allocation4 + $0x1a0] sm:$0xff]
    %v383 = vld [vmem:[#allocation4 + $0x1a8] sm:$0xff]
    %v384 = vld [vmem:[#allocation4 + $0x1b0] sm:$0xff]
    %v385 = vld [vmem:[#allocation4 + $0x1b8] sm:$0xff]
    %v386 = vld [vmem:[#allocation4 + $0x1c0] sm:$0xff]
    %v387 = vld [vmem:[#allocation4 + $0x1c8] sm:$0xff]
    %v388 = vld [vmem:[#allocation4 + $0x1d0] sm:$0xff]
    %v389 = vld [vmem:[#allocation4 + $0x1d8] sm:$0xff]
    %v390 = vld [vmem:[#allocation4 + $0x1e0] sm:$0xff]
    %v391 = vld [vmem:[#allocation4 + $0x1e8] sm:$0xff]
    %v392 = vld [vmem:[#allocation4 + $0x1f0] sm:$0xff]
    %v393 = vld [vmem:[#allocation4 + $0x1f8] sm:$0xff]
    %v394 = vld [vmem:[#allocation4 + $0x200] sm:$0xff]
    %v395 = vld [vmem:[#allocation4 + $0x208] sm:$0xff]
    %v396 = vld [vmem:[#allocation4 + $0x230] sm:$0xff]
    %397 = vmatprep.subr.mxu0 0.0
    %398 = vmatpush1.msra.mxu0 %v395
    %399 = vmatprep.subr.mxu0 0.0
    %400 = vmatpush1.msra.mxu0 %v394
    %401 = vmatprep.subr.mxu0 0.0
    %402 = vmatpush1.msra.mxu0 %v393
    %403 = vmatprep.subr.mxu0 0.0
    %404 = vmatpush1.msra.mxu0 %v392
    %405 = vmatprep.subr.mxu0 0.0
    %406 = vmatpush1.msra.mxu0 %v391
    %407 = vmatprep.subr.mxu0 0.0
    %408 = vmatpush1.msra.mxu0 %v390
    %409 = vmatprep.subr.mxu0 0.0
    %410 = vmatpush1.msra.mxu0 %v389
    %411 = vmatprep.subr.mxu0 0.0
    %412 = vmatpush1.msra.mxu0 %v388
    %413 = vmatprep.subr.mxu0 0.0
    %414 = vmatpush1.msra.mxu0 %v387
    %415 = vmatprep.subr.mxu0 0.0
    %416 = vmatpush1.msra.mxu0 %v386
    %417 = vmatprep.subr.mxu0 0.0
    %418 = vmatpush1.msra.mxu0 %v385
    %419 = vmatprep.subr.mxu0 0.0
    %420 = vmatpush1.msra.mxu0 %v384
    %421 = vmatprep.subr.mxu0 0.0
    %422 = vmatpush1.msra.mxu0 %v383
    %423 = vmatprep.subr.mxu0 0.0
    %424 = vmatpush1.msra.mxu0 %v382
    %425 = vmatprep.subr.mxu0 0.0
    %426 = vmatpush1.msra.mxu0 %v381
    %427 = vmatprep.subr.mxu0 0.0
    %428 = vmatpush1.msra.mxu0 %v380
    %429 = vmatprep.subr.mxu0 0.0
    %430 = vmatpush2.msra.mxu0 0.0
    %431 = vmatprep.subr.mxu0 0.0
    %432 = vmatpush2.msra.mxu0 0.0
    %433 = vmatprep.subr.mxu0 0.0
    %434 = vmatpush2.msra.mxu0 0.0
    %435 = vmatprep.subr.mxu0 0.0
    %436 = vmatpush2.msra.mxu0 0.0
    %437 = vmatprep.subr.mxu0 0.0
    %438 = vmatpush2.msra.mxu0 0.0
    %439 = vmatprep.subr.mxu0 0.0
    %440 = vmatpush2.msra.mxu0 0.0
    %441 = vmatprep.subr.mxu0 0.0
    %442 = vmatpush2.msra.mxu0 0.0
    %443 = vmatprep.subr.mxu0 0.0
    %444 = vmatpush2.msra.mxu0 0.0
    %445 = vmatprep.subr.mxu0 0.0
    %446 = vmatpush2.msra.mxu0 0.0
    %447 = vmatprep.subr.mxu0 0.0
    %448 = vmatpush2.msra.mxu0 0.0
    %449 = vmatprep.subr.mxu0 0.0
    %450 = vmatpush2.msra.mxu0 0.0
    %451 = vmatprep.subr.mxu0 0.0
    %452 = vmatpush2.msra.mxu0 0.0
    %453 = vmatprep.subr.mxu0 0.0
    %454 = vmatpush2.msra.mxu0 0.0
    %455 = vmatprep.subr.mxu0 0.0
    %456 = vmatpush2.msra.mxu0 0.0
    %457 = vmatprep.subr.mxu0 0.0
    %458 = vmatpush2.msra.mxu0 0.0
    %459 = vmatprep.subr.mxu0 0.0
    %460 = vmatpush2.msra.mxu0 0.0
    %461 = vmatprep.mubr.f32.mxu0 0.0
    %462 = vmatmul.mubr.f32.gmra.mxu0 %v379
    %v463 = vpop.f32.mrf.mxu0
    %v464 = vadd.f32 %v396, %v463
    %v465 = vpop.f32.mrf.mxu0
    %466 = vdwg.mxu0
    %vm467 = vcmask 31744
    %468 = vst.msk [vmem:[%s2] sm:$0xff] %vm467, %v464
    // Predicated region
    $region18: #{tpu_custom_call.1} parent=1 // pred_check
      _
    $region19: #{tpu_custom_call.1} parent=1 // pred_check_branch
      %470 = sbr.rel (0) target = $region21
    $region20: #{tpu_custom_call.1} parent=1 // pred_region
      _
    $region21: #{tpu_custom_call.1} parent=1 // pred_fallthru
      _
    // Predicated region
    $region22: #{tpu_custom_call.1} parent=1 // pred_check
      _
    $region23: #{tpu_custom_call.1} parent=1 // pred_check_branch
      %472 = sbr.rel (0) target = $region25
    $region24: #{tpu_custom_call.1} parent=1 // pred_region
      _
    $region25: #{tpu_custom_call.1} parent=1 // pred_fallthru
      _
    %473 = vsyncpa [#allocation3], 1
    %474 = vsyncpa [#allocation5], 1

</llo_original>
